<compile_context>
chip_gen: v6e
topology: v6e:2x2x1
jax: 0.10.0
libtpu: 0.0.40
codegen_flags: <defaults>
</compile_context>

<pallas_src>
import jax
import jax.numpy as jnp
from jax.experimental import pallas as pl
from jax.experimental.pallas import tpu as pltpu


def _round_up(a, b):
    return (a + b - 1) // b * b


def _vmem_capacity_bytes():
    """Physical VMEM per core; conservative 64 MiB (v7x) fallback."""
    try:
        cap = int(pltpu.get_tpu_info().vmem_capacity_bytes)
        if cap > 0:
            return cap
    except Exception:
        pass
    return 64 * 1024 * 1024


def _make_tau_kernel(nb, fused):
    """Kernel over one (nb, C, ts) activation block; nb is a static unroll."""

    def body(x, v, w1, b1, w2, b2, out_dtype):
        # x: (C, ts) stream dtype; w1: (Cmid, C); w2: (C, Cmid); biases f32.
        h = jnp.dot(w1, x, preferred_element_type=jnp.float32)          # MXU
        h = jnp.maximum(h + b1, 0.0)                                     # ReLU (f32)
        y = jnp.dot(w2, h.astype(w2.dtype),
                    preferred_element_type=jnp.float32) + b2             # MXU
        # Exact sigmoid via a single transcendental (EUP); no approx reciprocal.
        gate = 0.5 * jnp.tanh(0.5 * y) + 0.5
        if v is not None:
            gate = v.astype(jnp.float32) * gate
        return gate.astype(out_dtype)

    if fused:
        def kernel(x_ref, v_ref, w1_ref, b1_ref, w2_ref, b2_ref, o_ref):
            w1, b1 = w1_ref[...], b1_ref[...]
            w2, b2 = w2_ref[...], b2_ref[...]
            for b in range(nb):                       # static batch-pack unroll
                o_ref[b] = body(x_ref[b], v_ref[b], w1, b1, w2, b2, o_ref.dtype)
    else:
        def kernel(x_ref, w1_ref, b1_ref, w2_ref, b2_ref, o_ref):
            w1, b1 = w1_ref[...], b1_ref[...]
            w2, b2 = w2_ref[...], b2_ref[...]
            for b in range(nb):
                o_ref[b] = body(x_ref[b], None, w1, b1, w2, b2, o_ref.dtype)
    return kernel


def tau_forward(x_nchw, w1, b1, w2, b2, *, fuse_mul=None, stream_dtype=None,
                target_tile_bytes=2 * 1024 * 1024):
    """TAU forward.

    x_nchw:       (N, C, H, W)
    w1:           (Cmid, C)   -- conv1.weight[:, :, 0, 0]
    b1:           (Cmid,) or (Cmid, 1)
    w2:           (C, Cmid)   -- conv3.weight[:, :, 0, 0]
    b2:           (C,) or (C, 1)
    fuse_mul:     optional (N, C, H, W); if given, returns fuse_mul * TAU(x)
                  fused in the same kernel (BackEnd's fpm * gam pattern --
                  prefer this at call sites, it halves HBM traffic).
    stream_dtype: optional dtype (e.g. jnp.bfloat16) for the HBM<->VMEM
                  activation/weight streams; elementwise math stays f32.
    """
    N, C, H, W = x_nchw.shape
    Cmid = w1.shape[0]
    S = H * W

    io_dtype = jnp.dtype(stream_dtype) if stream_dtype is not None else jnp.dtype(x_nchw.dtype)
    itemsize = io_dtype.itemsize
    fused = fuse_mul is not None
    n_streams = 3 if fused else 2          # x (+ v) + output

    # --- weights: pad Cmid to a multiple of 8 with zeros (exact), cast once ---
    Cmid_p = _round_up(max(Cmid, 8), 8)
    w1p = jnp.zeros((Cmid_p, C), jnp.float32).at[:Cmid, :].set(w1.astype(jnp.float32))
    b1p = jnp.zeros((Cmid_p, 1), jnp.float32).at[:Cmid, :].set(
        b1.reshape(Cmid, 1).astype(jnp.float32))
    w2p = jnp.zeros((C, Cmid_p), jnp.float32).at[:, :Cmid].set(w2.astype(jnp.float32))
    b2p = b2.reshape(C, 1).astype(jnp.float32)
    w1p = w1p.astype(io_dtype)
    w2p = w2p.astype(io_dtype)

    # --- activations: pure reshape, no pad / slice copies ---
    x3 = x_nchw.reshape(N, C, S).astype(io_dtype)
    v3 = fuse_mul.reshape(N, C, S).astype(io_dtype) if fused else None

    # --- generation-aware tile / VMEM sizing ---
    vmem_cap = _vmem_capacity_bytes()
    w_bytes = 2 * (2 * Cmid_p * C * itemsize + (Cmid_p + C) * 4)       # dbl-buffered
    per_col_bytes = 2 * n_streams * C * itemsize                       # dbl-buffered streams
    budget = max(int(vmem_cap * 0.7) - w_bytes, per_col_bytes * 128)
    budget_cols = max(128, budget // per_col_bytes)
    target_cols = max(128, target_tile_bytes // (C * itemsize))
    tile_cols = int(min(budget_cols, target_cols))

    if S <= tile_cols:
        # Small spatial extent: full-S blocks, pack several batch rows per tile
        # so per-step overhead is amortized and both v7x cores stay busy.
        ts = S
        nb = int(max(1, min(N, tile_cols // max(S, 1))))
    else:
        # Large spatial extent: lane-aligned tile; partial last block is masked
        # by Pallas (garbage lanes are computed but never stored past S).
        nb = 1
        ts = max(128, (tile_cols // 128) * 128)

    grid = (pl.cdiv(N, nb), pl.cdiv(S, ts))

    block_bytes = nb * C * ts * itemsize
    usage = w_bytes + 2 * n_streams * block_bytes
    margin = 4 * C * ts * 4 + (1 << 20)            # f32 intermediates + scratch
    vmem_limit = int(min(vmem_cap, max(usage + margin, 32 * 1024 * 1024)))

    act_spec = pl.BlockSpec((nb, C, ts), lambda n, s: (n, 0, s))
    w_specs = [
        pl.BlockSpec((Cmid_p, C), lambda n, s: (0, 0)),   # W1 (resident)
        pl.BlockSpec((Cmid_p, 1), lambda n, s: (0, 0)),   # b1
        pl.BlockSpec((C, Cmid_p), lambda n, s: (0, 0)),   # W2 (resident)
        pl.BlockSpec((C, 1), lambda n, s: (0, 0)),        # b2
    ]

    if fused:
        operands = (x3, v3, w1p, b1p, w2p, b2p)
        in_specs = [act_spec, act_spec] + w_specs
    else:
        operands = (x3, w1p, b1p, w2p, b2p)
        in_specs = [act_spec] + w_specs

    out3 = pl.pallas_call(
        _make_tau_kernel(nb, fused),
        out_shape=jax.ShapeDtypeStruct((N, C, S), io_dtype),
        grid_spec=pltpu.PrefetchScalarGridSpec(
            num_scalar_prefetch=0,
            grid=grid,
            in_specs=in_specs,
            out_specs=act_spec,
        ),
        compiler_params=pltpu.CompilerParams(
            dimension_semantics=("parallel", "parallel"),
            vmem_limit_bytes=vmem_limit),
    )(*operands)

    return out3.reshape(N, C, H, W)


def init_tau_params(key, in_planes, ratio=16):
    """Matches BaseConv init: conv weight ~ N(0, 0.01), bias = 0."""
    cmid = in_planes // ratio
    assert cmid >= 1, "in_planes must be >= ratio"
    k1, k2 = jax.random.split(key)
    # conv1.weight: (cmid, in_planes, 1, 1) -> stored as (cmid, in_planes)
    w1 = jax.random.normal(k1, (cmid, in_planes), jnp.float32) * 0.01
    b1 = jnp.zeros((cmid, 1), jnp.float32)
    # conv3.weight: (in_planes, cmid, 1, 1) -> stored as (in_planes, cmid)
    w2 = jax.random.normal(k2, (in_planes, cmid), jnp.float32) * 0.01
    b2 = jnp.zeros((in_planes, 1), jnp.float32)
    return w1, b1, w2, b2


if __name__ == "__main__":
    key = jax.random.PRNGKey(0)
    k_x, k_v, k_p = jax.random.split(key, 3)

    # Small shapes consistent with TAU: batch=2, channels=64 (ratio=16 -> Cmid=4),
    # spatial 16x16.
    N, C, H, W = 2, 64, 16, 16
    x = jax.random.normal(k_x, (N, C, H, W), jnp.float32)
    v = jax.random.normal(k_v, (N, C, H, W), jnp.float32)   # stands in for "fpm"

    w1, b1, w2, b2 = init_tau_params(k_p, C, ratio=16)

    # Plain TAU (matches the PyTorch module's forward).
    out = jax.block_until_ready(tau_forward(x, w1, b1, w2, b2))
    # Fused "fpm * TAU(x)" variant (BackEnd's fpm * gam pattern).
    out_gated = jax.block_until_ready(tau_forward(x, w1, b1, w2, b2, fuse_mul=v))
    # bf16-streamed variant (bandwidth saver for v5e); math stays f32.
    out_bf16 = jax.block_until_ready(
        tau_forward(x, w1, b1, w2, b2, stream_dtype=jnp.bfloat16))

    # Pure-JAX reference (same math, no Pallas).
    x3 = x.reshape(N, C, H * W)
    h = jnp.maximum(jnp.einsum("mc,ncs->nms", w1, x3) + b1.reshape(1, -1, 1), 0.0)
    ref = jax.nn.sigmoid(jnp.einsum("cm,nms->ncs", w2, h) + b2.reshape(1, -1, 1))
    ref = ref.reshape(N, C, H, W)

    assert out.shape == (N, C, H, W)
    assert jnp.allclose(out, ref, atol=2e-3, rtol=2e-3), "TAU mismatch vs reference"
    assert jnp.allclose(out_gated, v * ref, atol=2e-3, rtol=2e-3), "fused gate mismatch"
    assert jnp.allclose(out_bf16.astype(jnp.float32), ref, atol=2e-2, rtol=2e-2), \
        "bf16-stream TAU mismatch"

    print("KERNEL_OK")
</pallas_src>

<mosaic_0001>
module attributes {stable_mosaic.version = 11 : i64} {
  func.func @kernel(%arg0: i32, %arg1: i32, %arg2: memref<2x64x256xf32, #tpu.memory_space<vmem>>, %arg3: memref<8x64xf32, #tpu.memory_space<vmem>>, %arg4: memref<8x1xf32, #tpu.memory_space<vmem>>, %arg5: memref<64x8xf32, #tpu.memory_space<vmem>>, %arg6: memref<64x1xf32, #tpu.memory_space<vmem>>, %arg7: memref<2x64x256xf32, #tpu.memory_space<vmem>>) attributes {dimension_semantics = [#tpu.dimension_semantics<parallel>, #tpu.dimension_semantics<parallel>], iteration_bounds = array<i64: 1, 1>, scalar_prefetch = 0 : i64, scratch_operands = 0 : i64, tpu.core_type = #tpu.core_type<tc>, window_params = [{transform_indices = @transform_0, window_bounds = array<i64: 2, 64, 256>}, {pipeline_mode = #tpu.pipeline_mode<synchronous>, transform_indices = @transform_1, window_bounds = array<i64: 8, 64>}, {pipeline_mode = #tpu.pipeline_mode<synchronous>, transform_indices = @transform_2, window_bounds = array<i64: 8, 1>}, {pipeline_mode = #tpu.pipeline_mode<synchronous>, transform_indices = @transform_3, window_bounds = array<i64: 64, 8>}, {pipeline_mode = #tpu.pipeline_mode<synchronous>, transform_indices = @transform_4, window_bounds = array<i64: 64, 1>}, {transform_indices = @transform_5, window_bounds = array<i64: 2, 64, 256>}]} {
    %c0 = arith.constant 0 : index
    %c0_0 = arith.constant 0 : index
    %0 = vector.load %arg3[%c0, %c0_0] : memref<8x64xf32, #tpu.memory_space<vmem>>, vector<8x64xf32>
    %c0_1 = arith.constant 0 : index
    %c0_2 = arith.constant 0 : index
    %1 = vector.load %arg4[%c0_1, %c0_2] : memref<8x1xf32, #tpu.memory_space<vmem>>, vector<8x1xf32>
    %c0_3 = arith.constant 0 : index
    %c0_4 = arith.constant 0 : index
    %2 = vector.load %arg5[%c0_3, %c0_4] : memref<64x8xf32, #tpu.memory_space<vmem>>, vector<64x8xf32>
    %c0_5 = arith.constant 0 : index
    %c0_6 = arith.constant 0 : index
    %3 = vector.load %arg6[%c0_5, %c0_6] : memref<64x1xf32, #tpu.memory_space<vmem>>, vector<64x1xf32>
    %c0_7 = arith.constant 0 : index
    %c0_8 = arith.constant 0 : index
    %c0_9 = arith.constant 0 : index
    %4 = vector.load %arg2[%c0_7, %c0_8, %c0_9] : memref<2x64x256xf32, #tpu.memory_space<vmem>>, vector<1x64x256xf32>
    %5 = vector.shape_cast %4 : vector<1x64x256xf32> to vector<64x256xf32>
    %cst = arith.constant dense<0.000000e+00> : vector<8x256xf32>
    %6 = tpu.matmul %0, %5, %cst {dimension_numbers = #tpu.dot_dimension_numbers<[1], [0], [0], [1], [0, 0, 1, 1], [], []>} : vector<8x64xf32>, vector<64x256xf32>, vector<8x256xf32> -> vector<8x256xf32>
    %7 = vector.broadcast %1 : vector<8x1xf32> to vector<8x256xf32>
    %8 = arith.addf %6, %7 : vector<8x256xf32>
    %cst_10 = arith.constant 0.000000e+00 : f32
    %9 = vector.broadcast %cst_10 : f32 to vector<8x256xf32>
    %10 = arith.maximumf %8, %9 : vector<8x256xf32>
    %cst_11 = arith.constant dense<0.000000e+00> : vector<64x256xf32>
    %11 = tpu.matmul %2, %10, %cst_11 {dimension_numbers = #tpu.dot_dimension_numbers<[1], [0], [0], [1], [0, 0, 1, 1], [], []>} : vector<64x8xf32>, vector<8x256xf32>, vector<64x256xf32> -> vector<64x256xf32>
    %12 = vector.broadcast %3 : vector<64x1xf32> to vector<64x256xf32>
    %13 = arith.addf %11, %12 : vector<64x256xf32>
    %cst_12 = arith.constant 5.000000e-01 : f32
    %14 = vector.broadcast %cst_12 : f32 to vector<64x256xf32>
    %15 = arith.mulf %14, %13 : vector<64x256xf32>
    %16 = math.tanh %15 : vector<64x256xf32>
    %cst_13 = arith.constant 5.000000e-01 : f32
    %17 = vector.broadcast %cst_13 : f32 to vector<64x256xf32>
    %18 = arith.mulf %17, %16 : vector<64x256xf32>
    %cst_14 = arith.constant 5.000000e-01 : f32
    %19 = vector.broadcast %cst_14 : f32 to vector<64x256xf32>
    %20 = arith.addf %18, %19 : vector<64x256xf32>
    %c0_15 = arith.constant 0 : index
    %c0_16 = arith.constant 0 : index
    %c0_17 = arith.constant 0 : index
    %21 = vector.load %arg7[%c0_15, %c0_16, %c0_17] : memref<2x64x256xf32, #tpu.memory_space<vmem>>, vector<1x64x256xf32>
    %22 = vector.shape_cast %21 : vector<1x64x256xf32> to vector<64x256xf32>
    %23 = vector.shape_cast %20 : vector<64x256xf32> to vector<1x64x256xf32>
    tpu.vector_store %arg7[%c0_15, %c0_16, %c0_17], %23 {strides = array<i32>} : memref<2x64x256xf32, #tpu.memory_space<vmem>>, vector<1x64x256xf32>,
    %c1 = arith.constant 1 : index
    %c0_18 = arith.constant 0 : index
    %c0_19 = arith.constant 0 : index
    %24 = vector.load %arg2[%c1, %c0_18, %c0_19] : memref<2x64x256xf32, #tpu.memory_space<vmem>>, vector<1x64x256xf32>
    %25 = vector.shape_cast %24 : vector<1x64x256xf32> to vector<64x256xf32>
    %cst_20 = arith.constant dense<0.000000e+00> : vector<8x256xf32>
    %26 = tpu.matmul %0, %25, %cst_20 {dimension_numbers = #tpu.dot_dimension_numbers<[1], [0], [0], [1], [0, 0, 1, 1], [], []>} : vector<8x64xf32>, vector<64x256xf32>, vector<8x256xf32> -> vector<8x256xf32>
    %27 = vector.broadcast %1 : vector<8x1xf32> to vector<8x256xf32>
    %28 = arith.addf %26, %27 : vector<8x256xf32>
    %cst_21 = arith.constant 0.000000e+00 : f32
    %29 = vector.broadcast %cst_21 : f32 to vector<8x256xf32>
    %30 = arith.maximumf %28, %29 : vector<8x256xf32>
    %cst_22 = arith.constant dense<0.000000e+00> : vector<64x256xf32>
    %31 = tpu.matmul %2, %30, %cst_22 {dimension_numbers = #tpu.dot_dimension_numbers<[1], [0], [0], [1], [0, 0, 1, 1], [], []>} : vector<64x8xf32>, vector<8x256xf32>, vector<64x256xf32> -> vector<64x256xf32>
    %32 = vector.broadcast %3 : vector<64x1xf32> to vector<64x256xf32>
    %33 = arith.addf %31, %32 : vector<64x256xf32>
    %cst_23 = arith.constant 5.000000e-01 : f32
    %34 = vector.broadcast %cst_23 : f32 to vector<64x256xf32>
    %35 = arith.mulf %34, %33 : vector<64x256xf32>
    %36 = math.tanh %35 : vector<64x256xf32>
    %cst_24 = arith.constant 5.000000e-01 : f32
    %37 = vector.broadcast %cst_24 : f32 to vector<64x256xf32>
    %38 = arith.mulf %37, %36 : vector<64x256xf32>
    %cst_25 = arith.constant 5.000000e-01 : f32
    %39 = vector.broadcast %cst_25 : f32 to vector<64x256xf32>
    %40 = arith.addf %38, %39 : vector<64x256xf32>
    %c1_26 = arith.constant 1 : index
    %c0_27 = arith.constant 0 : index
    %c0_28 = arith.constant 0 : index
    %41 = vector.load %arg7[%c1_26, %c0_27, %c0_28] : memref<2x64x256xf32, #tpu.memory_space<vmem>>, vector<1x64x256xf32>
    %42 = vector.shape_cast %41 : vector<1x64x256xf32> to vector<64x256xf32>
    %43 = vector.shape_cast %40 : vector<64x256xf32> to vector<1x64x256xf32>
    tpu.vector_store %arg7[%c1_26, %c0_27, %c0_28], %43 {strides = array<i32>} : memref<2x64x256xf32, #tpu.memory_space<vmem>>, vector<1x64x256xf32>,
    return
  }
  func.func @transform_0(%arg0: i32, %arg1: i32) -> (i32, i32, i32) {
    %c0_i32 = arith.constant 0 : i32
    %c0_i32_0 = arith.constant 0 : i32
    return %arg0, %c0_i32, %arg1 : i32, i32, i32
  }
  func.func @transform_1(%arg0: i32, %arg1: i32) -> (i32, i32) {
    %c0_i32 = arith.constant 0 : i32
    %c0_i32_0 = arith.constant 0 : i32
    %c0_i32_1 = arith.constant 0 : i32
    return %c0_i32, %c0_i32_0 : i32, i32
  }
  func.func @transform_2(%arg0: i32, %arg1: i32) -> (i32, i32) {
    %c0_i32 = arith.constant 0 : i32
    %c0_i32_0 = arith.constant 0 : i32
    %c0_i32_1 = arith.constant 0 : i32
    return %c0_i32, %c0_i32_0 : i32, i32
  }
  func.func @transform_3(%arg0: i32, %arg1: i32) -> (i32, i32) {
    %c0_i32 = arith.constant 0 : i32
    %c0_i32_0 = arith.constant 0 : i32
    %c0_i32_1 = arith.constant 0 : i32
    return %c0_i32, %c0_i32_0 : i32, i32
  }
  func.func @transform_4(%arg0: i32, %arg1: i32) -> (i32, i32) {
    %c0_i32 = arith.constant 0 : i32
    %c0_i32_0 = arith.constant 0 : i32
    %c0_i32_1 = arith.constant 0 : i32
    return %c0_i32, %c0_i32_0 : i32, i32
  }
  func.func @transform_5(%arg0: i32, %arg1: i32) -> (i32, i32, i32) {
    %c0_i32 = arith.constant 0 : i32
    %c0_i32_0 = arith.constant 0 : i32
    return %arg0, %c0_i32, %arg1 : i32, i32, i32
  }
}

</mosaic_0001>

<llo_original>
// kernel: tpu_custom_call.1
$region0: #{tpu_custom_call.1}
  #allocation0 [shape = 'u32[]', space=smem, size = 0x4, offset = 0x4, fixed_abs, tag = 'smem constant byte address 0x4 - core index']
  #allocation1 [shape = 'u32[144,128]{1,0:T(1,128)}', space=vmem, size = 0x12000, scoped, tag = 'internal scratch']
  %s0 = inlined_call_operand.hbm [shape: f32[2,64,256], index: 0, kind: input, shape index: {}]
  %s1 = inlined_call_operand.vmem [shape: f32[8,64], index: 1, kind: input, shape index: {}]
  %s2 = inlined_call_operand.vmem [shape: f32[8,1], index: 2, kind: input, shape index: {}]
  %s3 = inlined_call_operand.vmem [shape: f32[64,8], index: 3, kind: input, shape index: {}]
  %s4 = inlined_call_operand.vmem [shape: f32[64,1], index: 4, kind: input, shape index: {}]
  %s5 = inlined_call_operand.hbm [shape: f32[2,64,256], index: 5, kind: output, shape index: {}]
  %s6 = sld [smem:[#allocation0]]
  $region34: #{tpu_custom_call.1} parent=0
    _
  %s8 = ssub.s32 1, %s6
  %s9 = scalar_select 0, %s8, %s6
  $region1: #{tpu_custom_call.1} parent=0
    #allocation2 [shape = 'u8[131072]{0}', space=vmem, size = 0x20000, scoped, tag = 'input window, operand 0, single buffered']
    #allocation3 [shape = 's32[1]{0}', space=sflag, size = 0x4, scoped, tag = 'scoped memory for tpu_custom_call.1']
    #allocation4 [shape = 's32[1]{0}', space=sflag, size = 0x4, scoped, tag = 'scoped memory for tpu_custom_call.1']
    #allocation5 [shape = 'u8[131072]{0}', space=vmem, size = 0x20000, scoped, tag = 'output window, operand 0, single buffered']
    %10 = vsyncpa [#allocation3], 0
    %11 = vsyncpa [#allocation4], 0
    // Predicated region
    $region2: #{tpu_custom_call.1} parent=1 // pred_check
      _
    $region3: #{tpu_custom_call.1} parent=1 // pred_check_branch
      %13 = sbr.rel (0) target = $region5
    $region4: #{tpu_custom_call.1} parent=1 // pred_region
      %s15 = ssub.s32 4096, 4096
      %16 = vsyncadd [#allocation3], %s15
      %s17 = sshll.u32 [#allocation2], 4
      %s18 = int_to_ptr.vmem [resolvable:$true] %s17
      %23 = dma.hbm_to_vmem [thread:$0]  %s0, 4096, %s18, [#allocation3], 256, 256, 16
    $region5: #{tpu_custom_call.1} parent=1 // pred_fallthru
      _
    // Predicated region
    $region6: #{tpu_custom_call.1} parent=1 // pred_check
      _
    $region7: #{tpu_custom_call.1} parent=1 // pred_check_branch
      %25 = sbr.rel (0) target = $region9
    $region8: #{tpu_custom_call.1} parent=1 // pred_region
      _
    $region9: #{tpu_custom_call.1} parent=1 // pred_fallthru
      _
    // Predicated region
    $region10: #{tpu_custom_call.1} parent=1 // pred_check
      _
    $region11: #{tpu_custom_call.1} parent=1 // pred_check_branch
      %27 = sbr.rel (0) target = $region13
    $region12: #{tpu_custom_call.1} parent=1 // pred_region
      _
    $region13: #{tpu_custom_call.1} parent=1 // pred_fallthru
      _
    // Predicated region
    $region14: #{tpu_custom_call.1} parent=1 // pred_check
      _
    $region15: #{tpu_custom_call.1} parent=1 // pred_check_branch
      %29 = sbr.rel (0) target = $region17
    $region16: #{tpu_custom_call.1} parent=1 // pred_region
      _
    $region17: #{tpu_custom_call.1} parent=1 // pred_fallthru
      _
    // Predicated region
    $region18: #{tpu_custom_call.1} parent=1 // pred_check
      _
    $region19: #{tpu_custom_call.1} parent=1 // pred_check_branch
      %31 = sbr.rel (0) target = $region21
    $region20: #{tpu_custom_call.1} parent=1 // pred_region
      _
    $region21: #{tpu_custom_call.1} parent=1 // pred_fallthru
      _
    // Predicated region
    $region22: #{tpu_custom_call.1} parent=1 // pred_check
      _
    $region23: #{tpu_custom_call.1} parent=1 // pred_check_branch
      %33 = sbr.rel (0) target = $region25
    $region24: #{tpu_custom_call.1} parent=1 // pred_region
      %34 = dma.done [#allocation3], 4096
    $region25: #{tpu_custom_call.1} parent=1 // pred_fallthru
      _
    %v35 = vld [vmem:[%s1] sm:$0xff]
    %v36 = vld [vmem:[%s2] sm:$0xff]
    %v37 = vld [vmem:[%s3] sm:$0xff]
    %v38 = vld [vmem:[%s3 + $0x8] sm:$0xff]
    %v39 = vld [vmem:[%s3 + $0x10] sm:$0xff]
    %v40 = vld [vmem:[%s3 + $0x18] sm:$0xff]
    %v41 = vld [vmem:[%s3 + $0x20] sm:$0xff]
    %v42 = vld [vmem:[%s3 + $0x28] sm:$0xff]
    %v43 = vld [vmem:[%s3 + $0x30] sm:$0xff]
    %v44 = vld [vmem:[%s3 + $0x38] sm:$0xff]
    %v45 = vld [vmem:[%s4] sm:$0xff]
    %v46 = vld [vmem:[%s4 + $0x8] sm:$0xff]
    %v47 = vld [vmem:[%s4 + $0x10] sm:$0xff]
    %v48 = vld [vmem:[%s4 + $0x18] sm:$0xff]
    %v49 = vld [vmem:[%s4 + $0x20] sm:$0xff]
    %v50 = vld [vmem:[%s4 + $0x28] sm:$0xff]
    %v51 = vld [vmem:[%s4 + $0x30] sm:$0xff]
    %v52 = vld [vmem:[%s4 + $0x38] sm:$0xff]
    %v53 = vld [vmem:[#allocation2] sm:$0xff]
    %v54 = vld [vmem:[#allocation2 + $0x8] sm:$0xff]
    %v55 = vld [vmem:[#allocation2 + $0x10] sm:$0xff]
    %v56 = vld [vmem:[#allocation2 + $0x18] sm:$0xff]
    %v57 = vld [vmem:[#allocation2 + $0x20] sm:$0xff]
    %v58 = vld [vmem:[#allocation2 + $0x28] sm:$0xff]
    %v59 = vld [vmem:[#allocation2 + $0x30] sm:$0xff]
    %v60 = vld [vmem:[#allocation2 + $0x38] sm:$0xff]
    %v61 = vld [vmem:[#allocation2 + $0x40] sm:$0xff]
    %v62 = vld [vmem:[#allocation2 + $0x48] sm:$0xff]
    %v63 = vld [vmem:[#allocation2 + $0x50] sm:$0xff]
    %v64 = vld [vmem:[#allocation2 + $0x58] sm:$0xff]
    %v65 = vld [vmem:[#allocation2 + $0x60] sm:$0xff]
    %v66 = vld [vmem:[#allocation2 + $0x68] sm:$0xff]
    %v67 = vld [vmem:[#allocation2 + $0x70] sm:$0xff]
    %v68 = vld [vmem:[#allocation2 + $0x78] sm:$0xff]
    %70 = vset.pattern.permute.xlu0 0
    %71 = vperm.xlu0 %70, %v36
    %v72 = vpop.permute.xlu0 %71
    %vm74 = vcmask 523264
    %v76 = vsel %vm74, %v35, 0
    %78 = vmatprep.subr.mxu0 0.0
    %79 = vmatpush1.msra.mxu0 0.0
    %80 = vmatprep.subr.mxu0 0.0
    %81 = vmatpush1.msra.mxu0 0.0
    %82 = vmatprep.subr.mxu0 0.0
    %83 = vmatpush1.msra.mxu0 0.0
    %84 = vmatprep.subr.mxu0 0.0
    %85 = vmatpush1.msra.mxu0 0.0
    %86 = vmatprep.subr.mxu0 0.0
    %87 = vmatpush1.msra.mxu0 0.0
    %88 = vmatprep.subr.mxu0 0.0
    %89 = vmatpush1.msra.mxu0 0.0
    %90 = vmatprep.subr.mxu0 0.0
    %91 = vmatpush1.msra.mxu0 0.0
    %92 = vmatprep.subr.mxu0 0.0
    %93 = vmatpush1.msra.mxu0 0.0
    %94 = vmatprep.subr.mxu0 %v68
    %95 = vmatpush1.msra.mxu0 %v67
    %96 = vmatprep.subr.mxu0 %v66
    %97 = vmatpush1.msra.mxu0 %v65
    %98 = vmatprep.subr.mxu0 %v64
    %99 = vmatpush1.msra.mxu0 %v63
    %100 = vmatprep.subr.mxu0 %v62
    %101 = vmatpush1.msra.mxu0 %v61
    %102 = vmatprep.subr.mxu0 %v60
    %103 = vmatpush1.msra.mxu0 %v59
    %104 = vmatprep.subr.mxu0 %v58
    %105 = vmatpush1.msra.mxu0 %v57
    %106 = vmatprep.subr.mxu0 %v56
    %107 = vmatpush1.msra.mxu0 %v55
    %108 = vmatprep.subr.mxu0 %v54
    %109 = vmatpush1.msra.mxu0 %v53
    %110 = vmatprep.subr.mxu0 0.0
    %111 = vmatpush2.msra.mxu0 0.0
    %112 = vmatprep.subr.mxu0 0.0
    %113 = vmatpush2.msra.mxu0 0.0
    %114 = vmatprep.subr.mxu0 0.0
    %115 = vmatpush2.msra.mxu0 0.0
    %116 = vmatprep.subr.mxu0 0.0
    %117 = vmatpush2.msra.mxu0 0.0
    %118 = vmatprep.subr.mxu0 0.0
    %119 = vmatpush2.msra.mxu0 0.0
    %120 = vmatprep.subr.mxu0 0.0
    %121 = vmatpush2.msra.mxu0 0.0
    %122 = vmatprep.subr.mxu0 0.0
    %123 = vmatpush2.msra.mxu0 0.0
    %124 = vmatprep.subr.mxu0 0.0
    %125 = vmatpush2.msra.mxu0 0.0
    %126 = vmatprep.subr.mxu0 0.0
    %127 = vmatpush2.msra.mxu0 0.0
    %128 = vmatprep.subr.mxu0 0.0
    %129 = vmatpush2.msra.mxu0 0.0
    %130 = vmatprep.subr.mxu0 0.0
    %131 = vmatpush2.msra.mxu0 0.0
    %132 = vmatprep.subr.mxu0 0.0
    %133 = vmatpush2.msra.mxu0 0.0
    %134 = vmatprep.subr.mxu0 0.0
    %135 = vmatpush2.msra.mxu0 0.0
    %136 = vmatprep.subr.mxu0 0.0
    %137 = vmatpush2.msra.mxu0 0.0
    %138 = vmatprep.subr.mxu0 0.0
    %139 = vmatpush2.msra.mxu0 0.0
    %140 = vmatprep.subr.mxu0 0.0
    %141 = vmatpush2.msra.mxu0 0.0
    %142 = vmatprep.mubr.f32.mxu0 0.0
    %143 = vmatmul.mubr.f32.gmra.mxu0 %v76
    %v144 = vpop.f32.mrf.mxu0
    %v145 = vadd.f32 %v72, %v144
    %v146 = vpop.f32.mrf.mxu0
    %v147 = vadd.f32 %v72, %v146
    %148 = vdwg.mxu0
    %v149 = vmax.f32 %v145, 0.0
    %v150 = vmax.f32 %v147, 0.0
    %152 = vset.pattern.permute.xlu0 0
    %153 = vperm.xlu0 %152, %v45
    %v154 = vpop.permute.xlu0 %153
    %157 = vset.pattern.permute.xlu0 0
    %158 = vperm.xlu0 %157, %v46
    %v159 = vpop.permute.xlu0 %158
    %162 = vset.pattern.permute.xlu0 0
    %163 = vperm.xlu0 %162, %v47
    %v164 = vpop.permute.xlu0 %163
    %167 = vset.pattern.permute.xlu0 0
    %168 = vperm.xlu0 %167, %v48
    %v169 = vpop.permute.xlu0 %168
    %172 = vset.pattern.permute.xlu0 0
    %173 = vperm.xlu0 %172, %v49
    %v174 = vpop.permute.xlu0 %173
    %177 = vset.pattern.permute.xlu0 0
    %178 = vperm.xlu0 %177, %v50
    %v179 = vpop.permute.xlu0 %178
    %182 = vset.pattern.permute.xlu0 0
    %183 = vperm.xlu0 %182, %v51
    %v184 = vpop.permute.xlu0 %183
    %187 = vset.pattern.permute.xlu0 0
    %188 = vperm.xlu0 %187, %v52
    %v189 = vpop.permute.xlu0 %188
    %vm191 = vcmask 64512
    %v193 = vsel %vm191, %v37, 0
    %v196 = vsel %vm191, %v38, 0
    %v199 = vsel %vm191, %v39, 0
    %v202 = vsel %vm191, %v40, 0
    %v205 = vsel %vm191, %v41, 0
    %v208 = vsel %vm191, %v42, 0
    %v211 = vsel %vm191, %v43, 0
    %v214 = vsel %vm191, %v44, 0
    %216 = vmatprep.subr.mxu0 0.0
    %217 = vmatpush1.msra.mxu0 0.0
    %218 = vmatprep.subr.mxu0 0.0
    %219 = vmatpush1.msra.mxu0 0.0
    %220 = vmatprep.subr.mxu0 0.0
    %221 = vmatpush1.msra.mxu0 0.0
    %222 = vmatprep.subr.mxu0 0.0
    %223 = vmatpush1.msra.mxu0 0.0
    %224 = vmatprep.subr.mxu0 0.0
    %225 = vmatpush1.msra.mxu0 0.0
    %226 = vmatprep.subr.mxu0 0.0
    %227 = vmatpush1.msra.mxu0 0.0
    %228 = vmatprep.subr.mxu0 0.0
    %229 = vmatpush1.msra.mxu0 0.0
    %230 = vmatprep.subr.mxu0 0.0
    %231 = vmatpush1.msra.mxu0 0.0
    %232 = vmatprep.subr.mxu0 0.0
    %233 = vmatpush1.msra.mxu0 0.0
    %234 = vmatprep.subr.mxu0 0.0
    %235 = vmatpush1.msra.mxu0 0.0
    %236 = vmatprep.subr.mxu0 0.0
    %237 = vmatpush1.msra.mxu0 0.0
    %238 = vmatprep.subr.mxu0 0.0
    %239 = vmatpush1.msra.mxu0 0.0
    %240 = vmatprep.subr.mxu0 0.0
    %241 = vmatpush1.msra.mxu0 0.0
    %242 = vmatprep.subr.mxu0 0.0
    %243 = vmatpush1.msra.mxu0 0.0
    %244 = vmatprep.subr.mxu0 0.0
    %245 = vmatpush1.msra.mxu0 0.0
    %246 = vmatprep.subr.mxu0 %v150
    %247 = vmatpush1.msra.mxu0 %v149
    %248 = vmatprep.subr.mxu0 0.0
    %249 = vmatpush2.msra.mxu0 0.0
    %250 = vmatprep.subr.mxu0 0.0
    %251 = vmatpush2.msra.mxu0 0.0
    %252 = vmatprep.subr.mxu0 0.0
    %253 = vmatpush2.msra.mxu0 0.0
    %254 = vmatprep.subr.mxu0 0.0
    %255 = vmatpush2.msra.mxu0 0.0
    %256 = vmatprep.subr.mxu0 0.0
    %257 = vmatpush2.msra.mxu0 0.0
    %258 = vmatprep.subr.mxu0 0.0
    %259 = vmatpush2.msra.mxu0 0.0
    %260 = vmatprep.subr.mxu0 0.0
    %261 = vmatpush2.msra.mxu0 0.0
    %262 = vmatprep.subr.mxu0 0.0
    %263 = vmatpush2.msra.mxu0 0.0
    %264 = vmatprep.subr.mxu0 0.0
    %265 = vmatpush2.msra.mxu0 0.0
    %266 = vmatprep.subr.mxu0 0.0
    %267 = vmatpush2.msra.mxu0 0.0
    %268 = vmatprep.subr.mxu0 0.0
    %269 = vmatpush2.msra.mxu0 0.0
    %270 = vmatprep.subr.mxu0 0.0
    %271 = vmatpush2.msra.mxu0 0.0
    %272 = vmatprep.subr.mxu0 0.0
    %273 = vmatpush2.msra.mxu0 0.0
    %274 = vmatprep.subr.mxu0 0.0
    %275 = vmatpush2.msra.mxu0 0.0
    %276 = vmatprep.subr.mxu0 0.0
    %277 = vmatpush2.msra.mxu0 0.0
    %278 = vmatprep.subr.mxu0 0.0
    %279 = vmatpush2.msra.mxu0 0.0
    %280 = vmatprep.mubr.f32.mxu0 0.0
    %281 = vmatmul.mubr.f32.gmra.mxu0 %v193
    %v282 = vpop.f32.mrf.mxu0
    %v283 = vadd.f32 %v154, %v282
    %v284 = vpop.f32.mrf.mxu0
    %v285 = vadd.f32 %v154, %v284
    %286 = vmatprep.mubr.f32.mxu0 0.0
    %287 = vmatmul.mubr.f32.gmra.mxu0 %v196
    %v288 = vpop.f32.mrf.mxu0
    %v289 = vadd.f32 %v159, %v288
    %v290 = vpop.f32.mrf.mxu0
    %v291 = vadd.f32 %v159, %v290
    %292 = vmatprep.mubr.f32.mxu0 0.0
    %293 = vmatmul.mubr.f32.gmra.mxu0 %v199
    %v294 = vpop.f32.mrf.mxu0
    %v295 = vadd.f32 %v164, %v294
    %v296 = vpop.f32.mrf.mxu0
    %v297 = vadd.f32 %v164, %v296
    %298 = vmatprep.mubr.f32.mxu0 0.0
    %299 = vmatmul.mubr.f32.gmra.mxu0 %v202
    %v300 = vpop.f32.mrf.mxu0
    %v301 = vadd.f32 %v169, %v300
    %v302 = vpop.f32.mrf.mxu0
    %v303 = vadd.f32 %v169, %v302
    %304 = vmatprep.mubr.f32.mxu0 0.0
    %305 = vmatmul.mubr.f32.gmra.mxu0 %v205
    %v306 = vpop.f32.mrf.mxu0
    %v307 = vadd.f32 %v174, %v306
    %v308 = vpop.f32.mrf.mxu0
    %v309 = vadd.f32 %v174, %v308
    %310 = vmatprep.mubr.f32.mxu0 0.0
    %311 = vmatmul.mubr.f32.gmra.mxu0 %v208
    %v312 = vpop.f32.mrf.mxu0
    %v313 = vadd.f32 %v179, %v312
    %v314 = vpop.f32.mrf.mxu0
    %v315 = vadd.f32 %v179, %v314
    %316 = vmatprep.mubr.f32.mxu0 0.0
    %317 = vmatmul.mubr.f32.gmra.mxu0 %v211
    %v318 = vpop.f32.mrf.mxu0
    %v319 = vadd.f32 %v184, %v318
    %v320 = vpop.f32.mrf.mxu0
    %v321 = vadd.f32 %v184, %v320
    %322 = vmatprep.mubr.f32.mxu0 0.0
    %323 = vmatmul.mubr.f32.gmra.mxu0 %v214
    %v324 = vpop.f32.mrf.mxu0
    %v325 = vadd.f32 %v189, %v324
    %v326 = vpop.f32.mrf.mxu0
    %v327 = vadd.f32 %v189, %v326
    %328 = vdwg.mxu0
    %v329 = vmul.f32 %v283, 0.5
    %v330 = vmul.f32 %v285, 0.5
    %v331 = vmul.f32 %v289, 0.5
    %v332 = vmul.f32 %v291, 0.5
    %v333 = vmul.f32 %v295, 0.5
    %v334 = vmul.f32 %v297, 0.5
    %v335 = vmul.f32 %v301, 0.5
    %v336 = vmul.f32 %v303, 0.5
    %v337 = vmul.f32 %v307, 0.5
    %v338 = vmul.f32 %v309, 0.5
    %v339 = vmul.f32 %v313, 0.5
    %v340 = vmul.f32 %v315, 0.5
    %v341 = vmul.f32 %v319, 0.5
    %v342 = vmul.f32 %v321, 0.5
    %v343 = vmul.f32 %v325, 0.5
    %v344 = vmul.f32 %v327, 0.5
    %v345 = vtanh.pop %v329
    %v346 = vtanh.pop %v330
    %v347 = vtanh.pop %v331
    %v348 = vtanh.pop %v332
    %v349 = vtanh.pop %v333
    %v350 = vtanh.pop %v334
    %v351 = vtanh.pop %v335
    %v352 = vtanh.pop %v336
    %v353 = vtanh.pop %v337
    %v354 = vtanh.pop %v338
    %v355 = vtanh.pop %v339
    %v356 = vtanh.pop %v340
    %v357 = vtanh.pop %v341
    %v358 = vtanh.pop %v342
    %v359 = vtanh.pop %v343
    %v360 = vtanh.pop %v344
    %v361 = vmul.f32 %v345, 0.5
    %v362 = vmul.f32 %v346, 0.5
    %v363 = vmul.f32 %v347, 0.5
    %v364 = vmul.f32 %v348, 0.5
    %v365 = vmul.f32 %v349, 0.5
    %v366 = vmul.f32 %v350, 0.5
    %v367 = vmul.f32 %v351, 0.5
    %v368 = vmul.f32 %v352, 0.5
    %v369 = vmul.f32 %v353, 0.5
    %v370 = vmul.f32 %v354, 0.5
    %v371 = vmul.f32 %v355, 0.5
    %v372 = vmul.f32 %v356, 0.5
    %v373 = vmul.f32 %v357, 0.5
    %v374 = vmul.f32 %v358, 0.5
    %v375 = vmul.f32 %v359, 0.5
    %v376 = vmul.f32 %v360, 0.5
    %v377 = vadd.f32 %v361, 0.5
    %v378 = vadd.f32 %v362, 0.5
    %v379 = vadd.f32 %v363, 0.5
    %v380 = vadd.f32 %v364, 0.5
    %v381 = vadd.f32 %v365, 0.5
    %v382 = vadd.f32 %v366, 0.5
    %v383 = vadd.f32 %v367, 0.5
    %v384 = vadd.f32 %v368, 0.5
    %v385 = vadd.f32 %v369, 0.5
    %v386 = vadd.f32 %v370, 0.5
    %v387 = vadd.f32 %v371, 0.5
    %v388 = vadd.f32 %v372, 0.5
    %v389 = vadd.f32 %v373, 0.5
    %v390 = vadd.f32 %v374, 0.5
    %v391 = vadd.f32 %v375, 0.5
    %v392 = vadd.f32 %v376, 0.5
    %393 = vst [vmem:[#allocation5] sm:$0xff] %v377
    %394 = vst [vmem:[#allocation5 + $0x8] sm:$0xff] %v378
    %395 = vst [vmem:[#allocation5 + $0x10] sm:$0xff] %v379
    %396 = vst [vmem:[#allocation5 + $0x18] sm:$0xff] %v380
    %397 = vst [vmem:[#allocation5 + $0x20] sm:$0xff] %v381
    %398 = vst [vmem:[#allocation5 + $0x28] sm:$0xff] %v382
    %399 = vst [vmem:[#allocation5 + $0x30] sm:$0xff] %v383
    %400 = vst [vmem:[#allocation5 + $0x38] sm:$0xff] %v384
    %401 = vst [vmem:[#allocation5 + $0x40] sm:$0xff] %v385
    %402 = vst [vmem:[#allocation5 + $0x48] sm:$0xff] %v386
    %403 = vst [vmem:[#allocation5 + $0x50] sm:$0xff] %v387
    %404 = vst [vmem:[#allocation5 + $0x58] sm:$0xff] %v388
    %405 = vst [vmem:[#allocation5 + $0x60] sm:$0xff] %v389
    %406 = vst [vmem:[#allocation5 + $0x68] sm:$0xff] %v390
    %407 = vst [vmem:[#allocation5 + $0x70] sm:$0xff] %v391
    %408 = vst [vmem:[#allocation5 + $0x78] sm:$0xff] %v392
    %s409 = scalar_lea.vmem [#allocation2], 128
    %v410 = vld [vmem:[%s409] sm:$0xff]
    %v411 = vld [vmem:[%s409 + $0x8] sm:$0xff]
    %v412 = vld [vmem:[%s409 + $0x10] sm:$0xff]
    %v413 = vld [vmem:[%s409 + $0x18] sm:$0xff]
    %v414 = vld [vmem:[%s409 + $0x20] sm:$0xff]
    %v415 = vld [vmem:[%s409 + $0x28] sm:$0xff]
    %v416 = vld [vmem:[%s409 + $0x30] sm:$0xff]
    %v417 = vld [vmem:[%s409 + $0x38] sm:$0xff]
    %v418 = vld [vmem:[%s409 + $0x40] sm:$0xff]
    %v419 = vld [vmem:[%s409 + $0x48] sm:$0xff]
    %v420 = vld [vmem:[%s409 + $0x50] sm:$0xff]
    %v421 = vld [vmem:[%s409 + $0x58] sm:$0xff]
    %v422 = vld [vmem:[%s409 + $0x60] sm:$0xff]
    %v423 = vld [vmem:[%s409 + $0x68] sm:$0xff]
    %v424 = vld [vmem:[%s409 + $0x70] sm:$0xff]
    %v425 = vld [vmem:[%s409 + $0x78] sm:$0xff]
    %426 = vmatprep.subr.mxu0 0.0
    %427 = vmatpush1.msra.mxu0 0.0
    %428 = vmatprep.subr.mxu0 0.0
    %429 = vmatpush1.msra.mxu0 0.0
    %430 = vmatprep.subr.mxu0 0.0
    %431 = vmatpush1.msra.mxu0 0.0
    %432 = vmatprep.subr.mxu0 0.0
    %433 = vmatpush1.msra.mxu0 0.0
    %434 = vmatprep.subr.mxu0 0.0
    %435 = vmatpush1.msra.mxu0 0.0
    %436 = vmatprep.subr.mxu0 0.0
    %437 = vmatpush1.msra.mxu0 0.0
    %438 = vmatprep.subr.mxu0 0.0
    %439 = vmatpush1.msra.mxu0 0.0
    %440 = vmatprep.subr.mxu0 0.0
    %441 = vmatpush1.msra.mxu0 0.0
    %442 = vmatprep.subr.mxu0 %v425
    %443 = vmatpush1.msra.mxu0 %v424
    %444 = vmatprep.subr.mxu0 %v423
    %445 = vmatpush1.msra.mxu0 %v422
    %446 = vmatprep.subr.mxu0 %v421
    %447 = vmatpush1.msra.mxu0 %v420
    %448 = vmatprep.subr.mxu0 %v419
    %449 = vmatpush1.msra.mxu0 %v418
    %450 = vmatprep.subr.mxu0 %v417
    %451 = vmatpush1.msra.mxu0 %v416
    %452 = vmatprep.subr.mxu0 %v415
    %453 = vmatpush1.msra.mxu0 %v414
    %454 = vmatprep.subr.mxu0 %v413
    %455 = vmatpush1.msra.mxu0 %v412
    %456 = vmatprep.subr.mxu0 %v411
    %457 = vmatpush1.msra.mxu0 %v410
    %458 = vmatprep.subr.mxu0 0.0
    %459 = vmatpush2.msra.mxu0 0.0
    %460 = vmatprep.subr.mxu0 0.0
    %461 = vmatpush2.msra.mxu0 0.0
    %462 = vmatprep.subr.mxu0 0.0
    %463 = vmatpush2.msra.mxu0 0.0
    %464 = vmatprep.subr.mxu0 0.0
    %465 = vmatpush2.msra.mxu0 0.0
    %466 = vmatprep.subr.mxu0 0.0
    %467 = vmatpush2.msra.mxu0 0.0
    %468 = vmatprep.subr.mxu0 0.0
    %469 = vmatpush2.msra.mxu0 0.0
    %470 = vmatprep.subr.mxu0 0.0
    %471 = vmatpush2.msra.mxu0 0.0
    %472 = vmatprep.subr.mxu0 0.0
    %473 = vmatpush2.msra.mxu0 0.0
    %474 = vmatprep.subr.mxu0 0.0
    %475 = vmatpush2.msra.mxu0 0.0
    %476 = vmatprep.subr.mxu0 0.0
    %477 = vmatpush2.msra.mxu0 0.0
    %478 = vmatprep.subr.mxu0 0.0
    %479 = vmatpush2.msra.mxu0 0.0
    %480 = vmatprep.subr.mxu0 0.0
    %481 = vmatpush2.msra.mxu0 0.0
    %482 = vmatprep.subr.mxu0 0.0
    %483 = vmatpush2.msra.mxu0 0.0
    %484 = vmatprep.subr.mxu0 0.0
    %485 = vmatpush2.msra.mxu0 0.0
    %486 = vmatprep.subr.mxu0 0.0
    %487 = vmatpush2.msra.mxu0 0.0
    %488 = vmatprep.subr.mxu0 0.0
    %489 = vmatpush2.msra.mxu0 0.0
    %490 = vmatprep.mubr.f32.mxu0 0.0
    %491 = vmatmul.mubr.f32.gmra.mxu0 %v76
    %v492 = vpop.f32.mrf.mxu0
    %v493 = vadd.f32 %v72, %v492
    %v494 = vpop.f32.mrf.mxu0
    %v495 = vadd.f32 %v72, %v494
    %496 = vdwg.mxu0
    %v497 = vmax.f32 %v493, 0.0
    %v498 = vmax.f32 %v495, 0.0
    %499 = vmatprep.subr.mxu0 0.0
    %500 = vmatpush1.msra.mxu0 0.0
    %501 = vmatprep.subr.mxu0 0.0
    %502 = vmatpush1.msra.mxu0 0.0
    %503 = vmatprep.subr.mxu0 0.0
    %504 = vmatpush1.msra.mxu0 0.0
    %505 = vmatprep.subr.mxu0 0.0
    %506 = vmatpush1.msra.mxu0 0.0
    %507 = vmatprep.subr.mxu0 0.0
    %508 = vmatpush1.msra.mxu0 0.0
    %509 = vmatprep.subr.mxu0 0.0
    %510 = vmatpush1.msra.mxu0 0.0
    %511 = vmatprep.subr.mxu0 0.0
    %512 = vmatpush1.msra.mxu0 0.0
    %513 = vmatprep.subr.mxu0 0.0
    %514 = vmatpush1.msra.mxu0 0.0
    %515 = vmatprep.subr.mxu0 0.0
    %516 = vmatpush1.msra.mxu0 0.0
    %517 = vmatprep.subr.mxu0 0.0
    %518 = vmatpush1.msra.mxu0 0.0
    %519 = vmatprep.subr.mxu0 0.0
    %520 = vmatpush1.msra.mxu0 0.0
    %521 = vmatprep.subr.mxu0 0.0
    %522 = vmatpush1.msra.mxu0 0.0
    %523 = vmatprep.subr.mxu0 0.0
    %524 = vmatpush1.msra.mxu0 0.0
    %525 = vmatprep.subr.mxu0 0.0
    %526 = vmatpush1.msra.mxu0 0.0
    %527 = vmatprep.subr.mxu0 0.0
    %528 = vmatpush1.msra.mxu0 0.0
    %529 = vmatprep.subr.mxu0 %v498
    %530 = vmatpush1.msra.mxu0 %v497
    %531 = vmatprep.subr.mxu0 0.0
    %532 = vmatpush2.msra.mxu0 0.0
    %533 = vmatprep.subr.mxu0 0.0
    %534 = vmatpush2.msra.mxu0 0.0
    %535 = vmatprep.subr.mxu0 0.0
    %536 = vmatpush2.msra.mxu0 0.0
    %537 = vmatprep.subr.mxu0 0.0
    %538 = vmatpush2.msra.mxu0 0.0
    %539 = vmatprep.subr.mxu0 0.0
    %540 = vmatpush2.msra.mxu0 0.0
    %541 = vmatprep.subr.mxu0 0.0
    %542 = vmatpush2.msra.mxu0 0.0
    %543 = vmatprep.subr.mxu0 0.0
    %544 = vmatpush2.msra.mxu0 0.0
    %545 = vmatprep.subr.mxu0 0.0
    %546 = vmatpush2.msra.mxu0 0.0
    %547 = vmatprep.subr.mxu0 0.0
    %548 = vmatpush2.msra.mxu0 0.0
    %549 = vmatprep.subr.mxu0 0.0
    %550 = vmatpush2.msra.mxu0 0.0
    %551 = vmatprep.subr.mxu0 0.0
    %552 = vmatpush2.msra.mxu0 0.0
    %553 = vmatprep.subr.mxu0 0.0
    %554 = vmatpush2.msra.mxu0 0.0
    %555 = vmatprep.subr.mxu0 0.0
    %556 = vmatpush2.msra.mxu0 0.0
    %557 = vmatprep.subr.mxu0 0.0
    %558 = vmatpush2.msra.mxu0 0.0
    %559 = vmatprep.subr.mxu0 0.0
    %560 = vmatpush2.msra.mxu0 0.0
    %561 = vmatprep.subr.mxu0 0.0
    %562 = vmatpush2.msra.mxu0 0.0
    %563 = vmatprep.mubr.f32.mxu0 0.0
    %564 = vmatmul.mubr.f32.gmra.mxu0 %v193
    %v565 = vpop.f32.mrf.mxu0
    %v566 = vadd.f32 %v154, %v565
    %v567 = vpop.f32.mrf.mxu0
    %v568 = vadd.f32 %v154, %v567
    %569 = vmatprep.mubr.f32.mxu0 0.0
    %570 = vmatmul.mubr.f32.gmra.mxu0 %v196
    %v571 = vpop.f32.mrf.mxu0
    %v572 = vadd.f32 %v159, %v571
    %v573 = vpop.f32.mrf.mxu0
    %v574 = vadd.f32 %v159, %v573
    %575 = vmatprep.mubr.f32.mxu0 0.0
    %576 = vmatmul.mubr.f32.gmra.mxu0 %v199
    %v577 = vpop.f32.mrf.mxu0
    %v578 = vadd.f32 %v164, %v577
    %v579 = vpop.f32.mrf.mxu0
    %v580 = vadd.f32 %v164, %v579
    %581 = vmatprep.mubr.f32.mxu0 0.0
    %582 = vmatmul.mubr.f32.gmra.mxu0 %v202
    %v583 = vpop.f32.mrf.mxu0
    %v584 = vadd.f32 %v169, %v583
    %v585 = vpop.f32.mrf.mxu0
    %v586 = vadd.f32 %v169, %v585
    %587 = vmatprep.mubr.f32.mxu0 0.0
    %588 = vmatmul.mubr.f32.gmra.mxu0 %v205
    %v589 = vpop.f32.mrf.mxu0
    %v590 = vadd.f32 %v174, %v589
    %v591 = vpop.f32.mrf.mxu0
    %v592 = vadd.f32 %v174, %v591
    %593 = vmatprep.mubr.f32.mxu0 0.0
    %594 = vmatmul.mubr.f32.gmra.mxu0 %v208
    %v595 = vpop.f32.mrf.mxu0
    %v596 = vadd.f32 %v179, %v595
    %v597 = vpop.f32.mrf.mxu0
    %v598 = vadd.f32 %v179, %v597
    %599 = vmatprep.mubr.f32.mxu0 0.0
    %600 = vmatmul.mubr.f32.gmra.mxu0 %v211
    %v601 = vpop.f32.mrf.mxu0
    %v602 = vadd.f32 %v184, %v601
    %v603 = vpop.f32.mrf.mxu0
    %v604 = vadd.f32 %v184, %v603
    %605 = vmatprep.mubr.f32.mxu0 0.0
    %606 = vmatmul.mubr.f32.gmra.mxu0 %v214
    %v607 = vpop.f32.mrf.mxu0
    %v608 = vadd.f32 %v189, %v607
    %v609 = vpop.f32.mrf.mxu0
    %v610 = vadd.f32 %v189, %v609
    %611 = vdwg.mxu0
    %v612 = vmul.f32 %v566, 0.5
    %v613 = vmul.f32 %v568, 0.5
    %v614 = vmul.f32 %v572, 0.5
    %v615 = vmul.f32 %v574, 0.5
    %v616 = vmul.f32 %v578, 0.5
    %v617 = vmul.f32 %v580, 0.5
    %v618 = vmul.f32 %v584, 0.5
    %v619 = vmul.f32 %v586, 0.5
    %v620 = vmul.f32 %v590, 0.5
    %v621 = vmul.f32 %v592, 0.5
    %v622 = vmul.f32 %v596, 0.5
    %v623 = vmul.f32 %v598, 0.5
    %v624 = vmul.f32 %v602, 0.5
    %v625 = vmul.f32 %v604, 0.5
    %v626 = vmul.f32 %v608, 0.5
    %v627 = vmul.f32 %v610, 0.5
    %v628 = vtanh.pop %v612
    %v629 = vtanh.pop %v613
    %v630 = vtanh.pop %v614
    %v631 = vtanh.pop %v615
    %v632 = vtanh.pop %v616
    %v633 = vtanh.pop %v617
    %v634 = vtanh.pop %v618
    %v635 = vtanh.pop %v619
    %v636 = vtanh.pop %v620
    %v637 = vtanh.pop %v621
    %v638 = vtanh.pop %v622
    %v639 = vtanh.pop %v623
    %v640 = vtanh.pop %v624
    %v641 = vtanh.pop %v625
    %v642 = vtanh.pop %v626
    %v643 = vtanh.pop %v627
    %v644 = vmul.f32 %v628, 0.5
    %v645 = vmul.f32 %v629, 0.5
    %v646 = vmul.f32 %v630, 0.5
    %v647 = vmul.f32 %v631, 0.5
    %v648 = vmul.f32 %v632, 0.5
    %v649 = vmul.f32 %v633, 0.5
    %v650 = vmul.f32 %v634, 0.5
    %v651 = vmul.f32 %v635, 0.5
    %v652 = vmul.f32 %v636, 0.5
    %v653 = vmul.f32 %v637, 0.5
    %v654 = vmul.f32 %v638, 0.5
    %v655 = vmul.f32 %v639, 0.5
    %v656 = vmul.f32 %v640, 0.5
    %v657 = vmul.f32 %v641, 0.5
    %v658 = vmul.f32 %v642, 0.5
    %v659 = vmul.f32 %v643, 0.5
    %v660 = vadd.f32 %v644, 0.5
    %v661 = vadd.f32 %v645, 0.5
    %v662 = vadd.f32 %v646, 0.5
    %v663 = vadd.f32 %v647, 0.5
    %v664 = vadd.f32 %v648, 0.5
    %v665 = vadd.f32 %v649, 0.5
    %v666 = vadd.f32 %v650, 0.5
    %v667 = vadd.f32 %v651, 0.5
    %v668 = vadd.f32 %v652, 0.5
    %v669 = vadd.f32 %v653, 0.5
    %v670 = vadd.f32 %v654, 0.5
    %v671 = vadd.f32 %v655, 0.5
    %v672 = vadd.f32 %v656, 0.5
    %v673 = vadd.f32 %v657, 0.5
    %v674 = vadd.f32 %v658, 0.5
    %v675 = vadd.f32 %v659, 0.5
    %s676 = scalar_lea.vmem [#allocation5], 128
    %677 = vst [vmem:[%s676] sm:$0xff] %v660
    %678 = vst [vmem:[%s676 + $0x8] sm:$0xff] %v661
    %679 = vst [vmem:[%s676 + $0x10] sm:$0xff] %v662
    %680 = vst [vmem:[%s676 + $0x18] sm:$0xff] %v663
    %681 = vst [vmem:[%s676 + $0x20] sm:$0xff] %v664
    %682 = vst [vmem:[%s676 + $0x28] sm:$0xff] %v665
    %683 = vst [vmem:[%s676 + $0x30] sm:$0xff] %v666
    %684 = vst [vmem:[%s676 + $0x38] sm:$0xff] %v667
    %685 = vst [vmem:[%s676 + $0x40] sm:$0xff] %v668
    %686 = vst [vmem:[%s676 + $0x48] sm:$0xff] %v669
    %687 = vst [vmem:[%s676 + $0x50] sm:$0xff] %v670
    %688 = vst [vmem:[%s676 + $0x58] sm:$0xff] %v671
    %689 = vst [vmem:[%s676 + $0x60] sm:$0xff] %v672
    %690 = vst [vmem:[%s676 + $0x68] sm:$0xff] %v673
    %691 = vst [vmem:[%s676 + $0x70] sm:$0xff] %v674
    %692 = vst [vmem:[%s676 + $0x78] sm:$0xff] %v675
    // Predicated region
    $region26: #{tpu_custom_call.1} parent=1 // pred_check
      _
    $region27: #{tpu_custom_call.1} parent=1 // pred_check_branch
      %694 = sbr.rel (0) target = $region29
    $region28: #{tpu_custom_call.1} parent=1 // pred_region
      %s696 = ssub.s32 4096, 4096
      %697 = vsyncadd [#allocation4], %s696
      %s698 = sshll.u32 [#allocation5], 4
      %s699 = int_to_ptr.vmem [resolvable:$true] %s698
      %704 = dma.vmem_to_hbm [thread:$0]  %s699, 4096, %s5, [#allocation4], 256, 256, 16
    $region29: #{tpu_custom_call.1} parent=1 // pred_fallthru
      _
    // Predicated region
    $region30: #{tpu_custom_call.1} parent=1 // pred_check
      _
    $region31: #{tpu_custom_call.1} parent=1 // pred_check_branch
      %706 = sbr.rel (0) target = $region33
    $region32: #{tpu_custom_call.1} parent=1 // pred_region
      %707 = dma.done [#allocation4], 4096
    $region33: #{tpu_custom_call.1} parent=1 // pred_fallthru
      _
    %708 = vsyncpa [#allocation3], 1
    %709 = vsyncpa [#allocation4], 1

</llo_original>
